<compile_context>
chip_gen: v7x
topology: tpu7x:2x2x1
jax: 0.10.0
libtpu: 0.0.40
codegen_flags: <defaults>
</compile_context>

<pallas_src>
import jax
import jax.numpy as jnp
from jax import lax
from jax.experimental import pallas as pl
from jax.experimental.pallas import tpu as pltpu

C = 256  # channel count fixed by the module (planes = 256)


# -----------------------------------------------------------------------------
# Fused Pallas kernel: the entire BasicBlock on a (tm, C) row tile.
#   out = relu( (relu(x@W1 * s1 + b1)) @ W2 * s2 + b2 + x )
# W1/W2 are the bf16 centre-tap weight matrices (Cin, Cout); accumulation and
# the BN / residual / ReLU epilogues are f32.  Output is written exactly once.
# -----------------------------------------------------------------------------
def _fused_block_kernel(x_ref, w1_ref, w2_ref, s1_ref, b1_ref, s2_ref, b2_ref,
                        out_ref):
    x = x_ref[...]                                          # (tm, C) f32
    # conv1 (3x3 s=2 pad=1 on 1x1 spatial == centre-tap matmul) -> bn1 -> relu
    h = jnp.dot(x.astype(jnp.bfloat16), w1_ref[...],
                preferred_element_type=jnp.float32)
    h = jnp.maximum(h * s1_ref[...] + b1_ref[...], 0.0)
    # conv2 (3x3 s=1 pad=1 on 1x1 spatial == centre-tap matmul) -> bn2
    y = jnp.dot(h.astype(jnp.bfloat16), w2_ref[...],
                preferred_element_type=jnp.float32)
    y = y * s2_ref[...] + b2_ref[...] + x                   # + residual (f32)
    out_ref[...] = jnp.maximum(y, 0.0)                      # final relu


def _round_up(x, m):
    return (x + m - 1) // m * m


def _choose_m_tiling(M):
    """Row padding / tiling policy.

    - tiny M: one block (launch/overhead bound; megacore split would not help)
    - medium M: two parallel blocks so v7x's second TensorCore gets work
    - large M: 256/512-row tiles (multiples of the 128 lane/MXU quantum)
    Padded M is always a multiple of 16 (bf16 sublane quantum).
    """
    if M <= 128:
        m_pad = _round_up(M, 16)
        return m_pad, m_pad
    if M <= 512:
        m_pad = _round_up(M, 32)
        return m_pad, m_pad // 2            # 2 parallel blocks, tm % 16 == 0
    m_pad = _round_up(M, 256)
    return m_pad, (512 if m_pad % 512 == 0 else 256)


def fused_basic_block(x2d, p):
    """x2d: (M, C) f32 rows (one row per 1x1-spatial sample)."""
    M, c = x2d.shape
    assert c == C
    m_pad, tm = _choose_m_tiling(M)
    xp = jnp.pad(x2d, ((0, m_pad - M), (0, 0))) if m_pad != M else x2d

    out = pl.pallas_call(
        _fused_block_kernel,
        out_shape=jax.ShapeDtypeStruct((m_pad, C), jnp.float32),
        grid_spec=pltpu.PrefetchScalarGridSpec(
            num_scalar_prefetch=0,
            grid=(m_pad // tm,),
            in_specs=[
                pl.BlockSpec((tm, C), lambda i: (i, 0)),   # x rows (f32)
                pl.BlockSpec((C, C), lambda i: (0, 0)),    # W1 centre tap bf16
                pl.BlockSpec((C, C), lambda i: (0, 0)),    # W2 centre tap bf16
                pl.BlockSpec((1, C), lambda i: (0, 0)),    # bn1 scale
                pl.BlockSpec((1, C), lambda i: (0, 0)),    # bn1 shift
                pl.BlockSpec((1, C), lambda i: (0, 0)),    # bn2 scale
                pl.BlockSpec((1, C), lambda i: (0, 0)),    # bn2 shift
            ],
            out_specs=pl.BlockSpec((tm, C), lambda i: (i, 0)),
        ),
        compiler_params=pltpu.CompilerParams(
            dimension_semantics=("parallel",)),
    )(xp, p["w1c"], p["w2c"], p["s1_row"], p["sh1_row"],
      p["s2_row"], p["sh2_row"])
    return out[:M] if m_pad != M else out


# -----------------------------------------------------------------------------
# Parameters (deterministic, mirroring the module's __init__; BN in eval mode:
# running mean=0, var=1, gamma=1, beta=0, eps=1e-5).
# -----------------------------------------------------------------------------
def init_params(key):
    ks = jax.random.split(key, 2)

    def kaiming_oihw(k, cout, cin, kh, kw):
        # kaiming_normal_, mode='fan_out', nonlinearity='relu'
        std = (2.0 / (cout * kh * kw)) ** 0.5
        return std * jax.random.normal(k, (cout, cin, kh, kw), jnp.float32)

    def bn_scale_shift(c, eps=1e-5):
        gamma = jnp.ones((c,), jnp.float32)
        beta = jnp.zeros((c,), jnp.float32)
        mean = jnp.zeros((c,), jnp.float32)
        var = jnp.ones((c,), jnp.float32)
        scale = gamma / jnp.sqrt(var + eps)
        shift = beta - mean * scale
        return scale, shift

    w1 = kaiming_oihw(ks[0], C, C, 3, 3)   # BasicBlock.conv1 (stride 2)
    w2 = kaiming_oihw(ks[1], C, C, 3, 3)   # BasicBlock.conv2 (stride 1)
    s1, sh1 = bn_scale_shift(C)
    s2, sh2 = bn_scale_shift(C)

    def centre_tap_mat(w_oihw):            # (Cout,Cin,3,3) -> (Cin,Cout) bf16
        return jnp.transpose(w_oihw[:, :, 1, 1], (1, 0)).astype(jnp.bfloat16)

    return dict(
        # full f32 weights / BN params for the pure-JAX reference
        w1=w1, w2=w2, s1=s1, sh1=sh1, s2=s2, sh2=sh2,
        # kernel-side: centre-tap bf16 weight mats + (1,C) f32 BN rows,
        # all prepared once at init (nothing reshaped/padded in the hot path)
        w1c=centre_tap_mat(w1), w2c=centre_tap_mat(w2),
        s1_row=s1.reshape(1, C), sh1_row=sh1.reshape(1, C),
        s2_row=s2.reshape(1, C), sh2_row=sh2.reshape(1, C),
    )


# -----------------------------------------------------------------------------
# Forward pass (Attention_Net.forward)
# -----------------------------------------------------------------------------
def attention_net_forward(x_nchw, p):
    N, c, H, W = x_nchw.shape
    # The reference BasicBlock (stride=2, no residual downsample) only accepts
    # 1x1 spatial inputs; a padded stride-2 3x3 conv maps 1 -> 1.
    assert c == C and H == 1 and W == 1, (N, c, H, W)
    x2d = jnp.transpose(x_nchw, (0, 2, 3, 1)).reshape(N * H * W, C)
    y = fused_basic_block(x2d, p)          # self.layer (one fused BasicBlock)
    # `down = self.downsample(x)` is computed then discarded by the reference
    # forward(); `self.up_sample` is never called -- both dead code, dropped.
    return jnp.transpose(y.reshape(N, H, W, C), (0, 3, 1, 2))


# -----------------------------------------------------------------------------
# Pure-JAX f32 reference: full 3x3 convs (validates the centre-tap reduction).
# -----------------------------------------------------------------------------
def _conv_ref(x_nhwc, w_oihw, stride, pad):
    return lax.conv_general_dilated(
        x_nhwc, jnp.transpose(w_oihw, (2, 3, 1, 0)),
        window_strides=(stride, stride),
        padding=[(pad, pad), (pad, pad)],
        dimension_numbers=("NHWC", "HWIO", "NHWC"),
        precision=lax.Precision.HIGHEST)


def attention_net_ref(x_nchw, p):
    x = jnp.transpose(x_nchw, (0, 2, 3, 1))
    out = _conv_ref(x, p["w1"], 2, 1) * p["s1"] + p["sh1"]
    out = jnp.maximum(out, 0.0)
    out = _conv_ref(out, p["w2"], 1, 1) * p["s2"] + p["sh2"]
    out = out + x
    out = jnp.maximum(out, 0.0)
    return jnp.transpose(out, (0, 3, 1, 2))


if __name__ == "__main__":
    key = jax.random.PRNGKey(0)
    kx, kp = jax.random.split(key)
    params = init_params(kp)
    # Only 1x1 spatial inputs are accepted by the reference forward (see NOTE).
    x = jax.random.normal(kx, (2, C, 1, 1), jnp.float32)

    fwd = jax.jit(attention_net_forward)
    out = jax.block_until_ready(fwd(x, params))
    assert out.shape == (2, C, 1, 1), out.shape

    ref = attention_net_ref(x, params)
    max_err = float(jnp.max(jnp.abs(out - ref)))
    # bf16 matmul inputs with f32 accumulation vs. full-f32 reference.
    assert max_err < 2e-2, max_err

    print("KERNEL_OK")
</pallas_src>

<mosaic_0001>
module attributes {stable_mosaic.version = 11 : i64} {
  func.func @_fused_block_kernel(%arg0: i32, %arg1: memref<16x256xf32, #tpu.memory_space<vmem>>, %arg2: memref<256x256xbf16, #tpu.memory_space<vmem>>, %arg3: memref<256x256xbf16, #tpu.memory_space<vmem>>, %arg4: memref<1x256xf32, #tpu.memory_space<vmem>>, %arg5: memref<1x256xf32, #tpu.memory_space<vmem>>, %arg6: memref<1x256xf32, #tpu.memory_space<vmem>>, %arg7: memref<1x256xf32, #tpu.memory_space<vmem>>, %arg8: memref<16x256xf32, #tpu.memory_space<vmem>>) attributes {dimension_semantics = [#tpu.dimension_semantics<parallel>], iteration_bounds = array<i64: 1>, scalar_prefetch = 0 : i64, scratch_operands = 0 : i64, tpu.core_type = #tpu.core_type<tc>, window_params = [{transform_indices = @transform_0, window_bounds = array<i64: 16, 256>}, {pipeline_mode = #tpu.pipeline_mode<synchronous>, transform_indices = @transform_1, window_bounds = array<i64: 256, 256>}, {pipeline_mode = #tpu.pipeline_mode<synchronous>, transform_indices = @transform_2, window_bounds = array<i64: 256, 256>}, {pipeline_mode = #tpu.pipeline_mode<synchronous>, transform_indices = @transform_3, window_bounds = array<i64: 1, 256>}, {pipeline_mode = #tpu.pipeline_mode<synchronous>, transform_indices = @transform_4, window_bounds = array<i64: 1, 256>}, {pipeline_mode = #tpu.pipeline_mode<synchronous>, transform_indices = @transform_5, window_bounds = array<i64: 1, 256>}, {pipeline_mode = #tpu.pipeline_mode<synchronous>, transform_indices = @transform_6, window_bounds = array<i64: 1, 256>}, {transform_indices = @transform_7, window_bounds = array<i64: 16, 256>}]} {
    %c0 = arith.constant 0 : index
    %c0_0 = arith.constant 0 : index
    %0 = vector.load %arg1[%c0, %c0_0] : memref<16x256xf32, #tpu.memory_space<vmem>>, vector<16x256xf32>
    %1 = arith.truncf %0 : vector<16x256xf32> to vector<16x256xbf16>
    %c0_1 = arith.constant 0 : index
    %c0_2 = arith.constant 0 : index
    %2 = vector.load %arg2[%c0_1, %c0_2] : memref<256x256xbf16, #tpu.memory_space<vmem>>, vector<256x256xbf16>
    %cst = arith.constant dense<0.000000e+00> : vector<16x256xf32>
    %3 = tpu.matmul %1, %2, %cst {dimension_numbers = #tpu.dot_dimension_numbers<[1], [0], [0], [1], [0, 0, 1, 1], [], []>} : vector<16x256xbf16>, vector<256x256xbf16>, vector<16x256xf32> -> vector<16x256xf32>
    %c0_3 = arith.constant 0 : index
    %c0_4 = arith.constant 0 : index
    %4 = vector.load %arg4[%c0_3, %c0_4] : memref<1x256xf32, #tpu.memory_space<vmem>>, vector<1x256xf32>
    %5 = vector.broadcast %4 : vector<1x256xf32> to vector<16x256xf32>
    %6 = arith.mulf %3, %5 : vector<16x256xf32>
    %c0_5 = arith.constant 0 : index
    %c0_6 = arith.constant 0 : index
    %7 = vector.load %arg5[%c0_5, %c0_6] : memref<1x256xf32, #tpu.memory_space<vmem>>, vector<1x256xf32>
    %8 = vector.broadcast %7 : vector<1x256xf32> to vector<16x256xf32>
    %9 = arith.addf %6, %8 : vector<16x256xf32>
    %cst_7 = arith.constant 0.000000e+00 : f32
    %10 = vector.broadcast %cst_7 : f32 to vector<16x256xf32>
    %11 = arith.maximumf %9, %10 : vector<16x256xf32>
    %12 = arith.truncf %11 : vector<16x256xf32> to vector<16x256xbf16>
    %c0_8 = arith.constant 0 : index
    %c0_9 = arith.constant 0 : index
    %13 = vector.load %arg3[%c0_8, %c0_9] : memref<256x256xbf16, #tpu.memory_space<vmem>>, vector<256x256xbf16>
    %cst_10 = arith.constant dense<0.000000e+00> : vector<16x256xf32>
    %14 = tpu.matmul %12, %13, %cst_10 {dimension_numbers = #tpu.dot_dimension_numbers<[1], [0], [0], [1], [0, 0, 1, 1], [], []>} : vector<16x256xbf16>, vector<256x256xbf16>, vector<16x256xf32> -> vector<16x256xf32>
    %c0_11 = arith.constant 0 : index
    %c0_12 = arith.constant 0 : index
    %15 = vector.load %arg6[%c0_11, %c0_12] : memref<1x256xf32, #tpu.memory_space<vmem>>, vector<1x256xf32>
    %16 = vector.broadcast %15 : vector<1x256xf32> to vector<16x256xf32>
    %17 = arith.mulf %14, %16 : vector<16x256xf32>
    %c0_13 = arith.constant 0 : index
    %c0_14 = arith.constant 0 : index
    %18 = vector.load %arg7[%c0_13, %c0_14] : memref<1x256xf32, #tpu.memory_space<vmem>>, vector<1x256xf32>
    %19 = vector.broadcast %18 : vector<1x256xf32> to vector<16x256xf32>
    %20 = arith.addf %17, %19 : vector<16x256xf32>
    %21 = arith.addf %20, %0 : vector<16x256xf32>
    %cst_15 = arith.constant 0.000000e+00 : f32
    %22 = vector.broadcast %cst_15 : f32 to vector<16x256xf32>
    %23 = arith.maximumf %21, %22 : vector<16x256xf32>
    %c0_16 = arith.constant 0 : index
    %c0_17 = arith.constant 0 : index
    %24 = vector.load %arg8[%c0_16, %c0_17] : memref<16x256xf32, #tpu.memory_space<vmem>>, vector<16x256xf32>
    tpu.vector_store %arg8[%c0_16, %c0_17], %23 {strides = array<i32>} : memref<16x256xf32, #tpu.memory_space<vmem>>, vector<16x256xf32>,
    return
  }
  func.func @transform_0(%arg0: i32) -> (i32, i32) {
    %c0_i32 = arith.constant 0 : i32
    %c0_i32_0 = arith.constant 0 : i32
    return %arg0, %c0_i32 : i32, i32
  }
  func.func @transform_1(%arg0: i32) -> (i32, i32) {
    %c0_i32 = arith.constant 0 : i32
    %c0_i32_0 = arith.constant 0 : i32
    %c0_i32_1 = arith.constant 0 : i32
    return %c0_i32, %c0_i32_0 : i32, i32
  }
  func.func @transform_2(%arg0: i32) -> (i32, i32) {
    %c0_i32 = arith.constant 0 : i32
    %c0_i32_0 = arith.constant 0 : i32
    %c0_i32_1 = arith.constant 0 : i32
    return %c0_i32, %c0_i32_0 : i32, i32
  }
  func.func @transform_3(%arg0: i32) -> (i32, i32) {
    %c0_i32 = arith.constant 0 : i32
    %c0_i32_0 = arith.constant 0 : i32
    %c0_i32_1 = arith.constant 0 : i32
    return %c0_i32, %c0_i32_0 : i32, i32
  }
  func.func @transform_4(%arg0: i32) -> (i32, i32) {
    %c0_i32 = arith.constant 0 : i32
    %c0_i32_0 = arith.constant 0 : i32
    %c0_i32_1 = arith.constant 0 : i32
    return %c0_i32, %c0_i32_0 : i32, i32
  }
  func.func @transform_5(%arg0: i32) -> (i32, i32) {
    %c0_i32 = arith.constant 0 : i32
    %c0_i32_0 = arith.constant 0 : i32
    %c0_i32_1 = arith.constant 0 : i32
    return %c0_i32, %c0_i32_0 : i32, i32
  }
  func.func @transform_6(%arg0: i32) -> (i32, i32) {
    %c0_i32 = arith.constant 0 : i32
    %c0_i32_0 = arith.constant 0 : i32
    %c0_i32_1 = arith.constant 0 : i32
    return %c0_i32, %c0_i32_0 : i32, i32
  }
  func.func @transform_7(%arg0: i32) -> (i32, i32) {
    %c0_i32 = arith.constant 0 : i32
    %c0_i32_0 = arith.constant 0 : i32
    return %arg0, %c0_i32 : i32, i32
  }
}

</mosaic_0001>

<llo_original>
// kernel: attention_net_forward.1
$region0: #{attention_net_forward.1}
  #allocation0 [shape = 'u32[]', space=smem, size = 0x4, offset = 0x4, fixed_abs, tag = 'smem constant byte address 0x4 - core index']
  #allocation1 [shape = 'u32[144,128]{1,0:T(1,128)}', space=vmem, size = 0x12000, scoped, tag = 'internal scratch']
  %s0 = inlined_call_operand.vmem [shape: f32[16,256], index: 0, kind: input, shape index: {}]
  %s1 = inlined_call_operand.hbm [shape: bf16[256,256], index: 1, kind: input, shape index: {}]
  %s2 = inlined_call_operand.hbm [shape: bf16[256,256], index: 2, kind: input, shape index: {}]
  %s3 = inlined_call_operand.vmem [shape: f32[1,256], index: 3, kind: input, shape index: {}]
  %s4 = inlined_call_operand.vmem [shape: f32[1,256], index: 4, kind: input, shape index: {}]
  %s5 = inlined_call_operand.vmem [shape: f32[1,256], index: 5, kind: input, shape index: {}]
  %s6 = inlined_call_operand.vmem [shape: f32[1,256], index: 6, kind: input, shape index: {}]
  %s7 = inlined_call_operand.vmem [shape: f32[16,256], index: 7, kind: output, shape index: {}]
  %s8 = sld [smem:[#allocation0]]
  $region46: #{attention_net_forward.1} parent=0
    _
  %s10 = ssub.s32 1, %s8
  %s11 = scalar_select 0, %s10, %s8
  $region1: #{attention_net_forward.1} parent=0
    #allocation2 [shape = 'u8[131072]{0}', space=vmem, size = 0x20000, scoped, tag = 'input window, operand 1, single buffered']
    #allocation3 [shape = 's32[1]{0}', space=sflag, size = 0x4, scoped, tag = 'scoped memory for attention_net_forward.1']
    #allocation4 [shape = 'u8[131072]{0}', space=vmem, size = 0x20000, scoped, tag = 'input window, operand 2, single buffered']
    #allocation5 [shape = 's32[1]{0}', space=sflag, size = 0x4, scoped, tag = 'scoped memory for attention_net_forward.1']
    %12 = vsyncpa [#allocation3], 0
    %13 = vsyncpa [#allocation5], 0
    // Predicated region
    $region2: #{attention_net_forward.1} parent=1 // pred_check
      _
    $region3: #{attention_net_forward.1} parent=1 // pred_check_branch
      %15 = sbr.rel (0) target = $region5
    $region4: #{attention_net_forward.1} parent=1 // pred_region
      _
    $region5: #{attention_net_forward.1} parent=1 // pred_fallthru
      _
    // Predicated region
    $region6: #{attention_net_forward.1} parent=1 // pred_check
      _
    $region7: #{attention_net_forward.1} parent=1 // pred_check_branch
      %17 = sbr.rel (0) target = $region9
    $region8: #{attention_net_forward.1} parent=1 // pred_region
      %s19 = ssub.s32 4096, 4096
      %20 = vsyncadd [#allocation3], %s19
      %s21 = sshll.u32 [#allocation2], 4
      %s22 = int_to_ptr.vmem [resolvable:$true] %s21
      %27 = dma.hbm_to_vmem [thread:$0]  %s1, 4096, %s22, [#allocation3], 128, 128, 8
    $region9: #{attention_net_forward.1} parent=1 // pred_fallthru
      _
    // Predicated region
    $region10: #{attention_net_forward.1} parent=1 // pred_check
      _
    $region11: #{attention_net_forward.1} parent=1 // pred_check_branch
      %29 = sbr.rel (0) target = $region13
    $region12: #{attention_net_forward.1} parent=1 // pred_region
      %s31 = ssub.s32 4096, 4096
      %32 = vsyncadd [#allocation5], %s31
      %s33 = sshll.u32 [#allocation4], 4
      %s34 = int_to_ptr.vmem [resolvable:$true] %s33
      %39 = dma.hbm_to_vmem [thread:$0]  %s2, 4096, %s34, [#allocation5], 128, 128, 8
    $region13: #{attention_net_forward.1} parent=1 // pred_fallthru
      _
    // Predicated region
    $region14: #{attention_net_forward.1} parent=1 // pred_check
      _
    $region15: #{attention_net_forward.1} parent=1 // pred_check_branch
      %41 = sbr.rel (0) target = $region17
    $region16: #{attention_net_forward.1} parent=1 // pred_region
      _
    $region17: #{attention_net_forward.1} parent=1 // pred_fallthru
      _
    // Predicated region
    $region18: #{attention_net_forward.1} parent=1 // pred_check
      _
    $region19: #{attention_net_forward.1} parent=1 // pred_check_branch
      %43 = sbr.rel (0) target = $region21
    $region20: #{attention_net_forward.1} parent=1 // pred_region
      _
    $region21: #{attention_net_forward.1} parent=1 // pred_fallthru
      _
    // Predicated region
    $region22: #{attention_net_forward.1} parent=1 // pred_check
      _
    $region23: #{attention_net_forward.1} parent=1 // pred_check_branch
      %45 = sbr.rel (0) target = $region25
    $region24: #{attention_net_forward.1} parent=1 // pred_region
      _
    $region25: #{attention_net_forward.1} parent=1 // pred_fallthru
      _
    // Predicated region
    $region26: #{attention_net_forward.1} parent=1 // pred_check
      _
    $region27: #{attention_net_forward.1} parent=1 // pred_check_branch
      %47 = sbr.rel (0) target = $region29
    $region28: #{attention_net_forward.1} parent=1 // pred_region
      _
    $region29: #{attention_net_forward.1} parent=1 // pred_fallthru
      _
    // Predicated region
    $region30: #{attention_net_forward.1} parent=1 // pred_check
      _
    $region31: #{attention_net_forward.1} parent=1 // pred_check_branch
      %49 = sbr.rel (0) target = $region33
    $region32: #{attention_net_forward.1} parent=1 // pred_region
      %50 = dma.done [#allocation3], 4096
    $region33: #{attention_net_forward.1} parent=1 // pred_fallthru
      _
    // Predicated region
    $region34: #{attention_net_forward.1} parent=1 // pred_check
      _
    $region35: #{attention_net_forward.1} parent=1 // pred_check_branch
      %52 = sbr.rel (0) target = $region37
    $region36: #{attention_net_forward.1} parent=1 // pred_region
      %53 = dma.done [#allocation5], 4096
    $region37: #{attention_net_forward.1} parent=1 // pred_fallthru
      _
    %v54 = vld [vmem:[%s0] sm:$0xff]
    %v55 = vld [vmem:[%s0 + $0x8] sm:$0xff]
    %v56 = vld [vmem:[%s0 + $0x10] sm:$0xff]
    %v57 = vld [vmem:[%s0 + $0x18] sm:$0xff]
    %v58 = vpack.c.bf16 %v56, %v54
    %v59 = vpack.c.bf16 %v57, %v55
    %v60 = vld [vmem:[#allocation2] sm:$0xff]
    %v61 = vld [vmem:[#allocation2 + $0x8] sm:$0xff]
    %v62 = vld [vmem:[#allocation2 + $0x10] sm:$0xff]
    %v63 = vld [vmem:[#allocation2 + $0x18] sm:$0xff]
    %v64 = vld [vmem:[#allocation2 + $0x20] sm:$0xff]
    %v65 = vld [vmem:[#allocation2 + $0x28] sm:$0xff]
    %v66 = vld [vmem:[#allocation2 + $0x30] sm:$0xff]
    %v67 = vld [vmem:[#allocation2 + $0x38] sm:$0xff]
    %v68 = vld [vmem:[#allocation2 + $0x40] sm:$0xff]
    %v69 = vld [vmem:[#allocation2 + $0x48] sm:$0xff]
    %v70 = vld [vmem:[#allocation2 + $0x50] sm:$0xff]
    %v71 = vld [vmem:[#allocation2 + $0x58] sm:$0xff]
    %v72 = vld [vmem:[#allocation2 + $0x60] sm:$0xff]
    %v73 = vld [vmem:[#allocation2 + $0x68] sm:$0xff]
    %v74 = vld [vmem:[#allocation2 + $0x70] sm:$0xff]
    %v75 = vld [vmem:[#allocation2 + $0x78] sm:$0xff]
    %v76 = vld [vmem:[#allocation2 + $0x80] sm:$0xff]
    %v77 = vld [vmem:[#allocation2 + $0x88] sm:$0xff]
    %v78 = vld [vmem:[#allocation2 + $0x90] sm:$0xff]
    %v79 = vld [vmem:[#allocation2 + $0x98] sm:$0xff]
    %v80 = vld [vmem:[#allocation2 + $0xa0] sm:$0xff]
    %v81 = vld [vmem:[#allocation2 + $0xa8] sm:$0xff]
    %v82 = vld [vmem:[#allocation2 + $0xb0] sm:$0xff]
    %v83 = vld [vmem:[#allocation2 + $0xb8] sm:$0xff]
    %v84 = vld [vmem:[#allocation2 + $0xc0] sm:$0xff]
    %v85 = vld [vmem:[#allocation2 + $0xc8] sm:$0xff]
    %v86 = vld [vmem:[#allocation2 + $0xd0] sm:$0xff]
    %v87 = vld [vmem:[#allocation2 + $0xd8] sm:$0xff]
    %v88 = vld [vmem:[#allocation2 + $0xe0] sm:$0xff]
    %v89 = vld [vmem:[#allocation2 + $0xe8] sm:$0xff]
    %v90 = vld [vmem:[#allocation2 + $0xf0] sm:$0xff]
    %v91 = vld [vmem:[#allocation2 + $0xf8] sm:$0xff]
    %v124 = vunpack.c.l.b16 %v60
    %v125 = vunpack.c.h.b16 %v60
    %v126 = vunpack.c.l.b16 %v61
    %v127 = vunpack.c.h.b16 %v61
    %v128 = vunpack.c.l.b16 %v62
    %v129 = vunpack.c.h.b16 %v62
    %v130 = vunpack.c.l.b16 %v63
    %v131 = vunpack.c.h.b16 %v63
    %v132 = vunpack.c.l.b16 %v64
    %v133 = vunpack.c.h.b16 %v64
    %v134 = vunpack.c.l.b16 %v65
    %v135 = vunpack.c.h.b16 %v65
    %v136 = vunpack.c.l.b16 %v66
    %v137 = vunpack.c.h.b16 %v66
    %v138 = vunpack.c.l.b16 %v67
    %v139 = vunpack.c.h.b16 %v67
    %v140 = vunpack.c.l.b16 %v68
    %v141 = vunpack.c.h.b16 %v68
    %v142 = vunpack.c.l.b16 %v69
    %v143 = vunpack.c.h.b16 %v69
    %v144 = vunpack.c.l.b16 %v70
    %v145 = vunpack.c.h.b16 %v70
    %v146 = vunpack.c.l.b16 %v71
    %v147 = vunpack.c.h.b16 %v71
    %v148 = vunpack.c.l.b16 %v72
    %v149 = vunpack.c.h.b16 %v72
    %v150 = vunpack.c.l.b16 %v73
    %v151 = vunpack.c.h.b16 %v73
    %v152 = vunpack.c.l.b16 %v74
    %v153 = vunpack.c.h.b16 %v74
    %v154 = vunpack.c.l.b16 %v75
    %v155 = vunpack.c.h.b16 %v75
    %v156 = vunpack.c.l.b16 %v76
    %v157 = vunpack.c.h.b16 %v76
    %v158 = vunpack.c.l.b16 %v77
    %v159 = vunpack.c.h.b16 %v77
    %v160 = vunpack.c.l.b16 %v78
    %v161 = vunpack.c.h.b16 %v78
    %v162 = vunpack.c.l.b16 %v79
    %v163 = vunpack.c.h.b16 %v79
    %v164 = vunpack.c.l.b16 %v80
    %v165 = vunpack.c.h.b16 %v80
    %v166 = vunpack.c.l.b16 %v81
    %v167 = vunpack.c.h.b16 %v81
    %v168 = vunpack.c.l.b16 %v82
    %v169 = vunpack.c.h.b16 %v82
    %v170 = vunpack.c.l.b16 %v83
    %v171 = vunpack.c.h.b16 %v83
    %v172 = vunpack.c.l.b16 %v84
    %v173 = vunpack.c.h.b16 %v84
    %v174 = vunpack.c.l.b16 %v85
    %v175 = vunpack.c.h.b16 %v85
    %v176 = vunpack.c.l.b16 %v86
    %v177 = vunpack.c.h.b16 %v86
    %v178 = vunpack.c.l.b16 %v87
    %v179 = vunpack.c.h.b16 %v87
    %v180 = vunpack.c.l.b16 %v88
    %v181 = vunpack.c.h.b16 %v88
    %v182 = vunpack.c.l.b16 %v89
    %v183 = vunpack.c.h.b16 %v89
    %v184 = vunpack.c.l.b16 %v90
    %v185 = vunpack.c.h.b16 %v90
    %v186 = vunpack.c.l.b16 %v91
    %v187 = vunpack.c.h.b16 %v91
    %v188 = vpack.c.b16 %v126, %v124
    %v189 = vpack.c.b16 %v127, %v125
    %v190 = vpack.c.b16 %v130, %v128
    %v191 = vpack.c.b16 %v131, %v129
    %v192 = vpack.c.b16 %v134, %v132
    %v193 = vpack.c.b16 %v135, %v133
    %v194 = vpack.c.b16 %v138, %v136
    %v195 = vpack.c.b16 %v139, %v137
    %v196 = vpack.c.b16 %v142, %v140
    %v197 = vpack.c.b16 %v143, %v141
    %v198 = vpack.c.b16 %v146, %v144
    %v199 = vpack.c.b16 %v147, %v145
    %v200 = vpack.c.b16 %v150, %v148
    %v201 = vpack.c.b16 %v151, %v149
    %v202 = vpack.c.b16 %v154, %v152
    %v203 = vpack.c.b16 %v155, %v153
    %v204 = vpack.c.b16 %v158, %v156
    %v205 = vpack.c.b16 %v159, %v157
    %v206 = vpack.c.b16 %v162, %v160
    %v207 = vpack.c.b16 %v163, %v161
    %v208 = vpack.c.b16 %v166, %v164
    %v209 = vpack.c.b16 %v167, %v165
    %v210 = vpack.c.b16 %v170, %v168
    %v211 = vpack.c.b16 %v171, %v169
    %v212 = vpack.c.b16 %v174, %v172
    %v213 = vpack.c.b16 %v175, %v173
    %v214 = vpack.c.b16 %v178, %v176
    %v215 = vpack.c.b16 %v179, %v177
    %v216 = vpack.c.b16 %v182, %v180
    %v217 = vpack.c.b16 %v183, %v181
    %v218 = vpack.c.b16 %v186, %v184
    %v219 = vpack.c.b16 %v187, %v185
    %252 = vmatprep.subr.bf16.mxu0 %v189
    %253 = vmatpush1.bf16.msra.mxu0 %v188
    %254 = vmatprep.subr.bf16.mxu0 %v191
    %255 = vmatpush1.bf16.msra.mxu0 %v190
    %256 = vmatprep.subr.bf16.mxu0 %v193
    %257 = vmatpush1.bf16.msra.mxu0 %v192
    %258 = vmatprep.subr.bf16.mxu0 %v195
    %259 = vmatpush1.bf16.msra.mxu0 %v194
    %260 = vmatprep.subr.bf16.mxu0 %v197
    %261 = vmatpush1.bf16.msra.mxu0 %v196
    %262 = vmatprep.subr.bf16.mxu0 %v199
    %263 = vmatpush1.bf16.msra.mxu0 %v198
    %264 = vmatprep.subr.bf16.mxu0 %v201
    %265 = vmatpush1.bf16.msra.mxu0 %v200
    %266 = vmatprep.subr.bf16.mxu0 %v203
    %267 = vmatpush1.bf16.msra.mxu0 %v202
    %268 = vmatprep.subr.bf16.mxu0 %v205
    %269 = vmatpush1.bf16.msra.mxu0 %v204
    %270 = vmatprep.subr.bf16.mxu0 %v207
    %271 = vmatpush1.bf16.msra.mxu0 %v206
    %272 = vmatprep.subr.bf16.mxu0 %v209
    %273 = vmatpush1.bf16.msra.mxu0 %v208
    %274 = vmatprep.subr.bf16.mxu0 %v211
    %275 = vmatpush1.bf16.msra.mxu0 %v210
    %276 = vmatprep.subr.bf16.mxu0 %v213
    %277 = vmatpush1.bf16.msra.mxu0 %v212
    %278 = vmatprep.subr.bf16.mxu0 %v215
    %279 = vmatpush1.bf16.msra.mxu0 %v214
    %280 = vmatprep.subr.bf16.mxu0 %v217
    %281 = vmatpush1.bf16.msra.mxu0 %v216
    %282 = vmatprep.subr.bf16.mxu0 %v219
    %283 = vmatpush1.bf16.msra.mxu0 %v218
    %284 = vmatprep.mubr.bf16.mxu0 %v59
    %285 = vmatmul.mubr.bf16.gmra.mrb[0].mxu0 %v58
    %v286 = vpop.f32.mrb[0].mxu0
    %v287 = vadd.f32 0.0, %v286
    %v288 = vpop.f32.mrb[0].mxu0
    %v289 = vadd.f32 0.0, %v288
    %v290 = vpop.f32.mrb[0].mxu0
    %v291 = vadd.f32 0.0, %v290
    %v292 = vpop.f32.mrb[0].mxu0
    %v293 = vadd.f32 0.0, %v292
    %294 = vdwg.mxu0
    %v295 = vld [vmem:[%s3] sm:$0x3]
    %v297 = vlaneseq
    %v298 = vshrl.u32 %v297, 7
    %v299 = vsub.s32 0, %v298
    %v300 = vrot.slane %v295, %v299
    %v301 = vlaneseq
    %v302 = vshrl.u32 %v301, 7
    %v303 = vsub.s32 1, %v302
    %v304 = vrot.slane %v295, %v303
    %v307 = vmul.f32 %v287, %v300
    %v308 = vmul.f32 %v289, %v304
    %v309 = vmul.f32 %v291, %v300
    %v310 = vmul.f32 %v293, %v304
    %v311 = vld [vmem:[%s4] sm:$0x3]
    %v313 = vlaneseq
    %v314 = vshrl.u32 %v313, 7
    %v315 = vsub.s32 0, %v314
    %v316 = vrot.slane %v311, %v315
    %v317 = vlaneseq
    %v318 = vshrl.u32 %v317, 7
    %v319 = vsub.s32 1, %v318
    %v320 = vrot.slane %v311, %v319
    %v323 = vadd.f32 %v307, %v316
    %v324 = vadd.f32 %v308, %v320
    %v325 = vadd.f32 %v309, %v316
    %v326 = vadd.f32 %v310, %v320
    %v327 = vmax.f32 %v323, 0.0
    %v328 = vmax.f32 %v324, 0.0
    %v329 = vmax.f32 %v325, 0.0
    %v330 = vmax.f32 %v326, 0.0
    %v331 = vpack.c.bf16 %v329, %v327
    %v332 = vpack.c.bf16 %v330, %v328
    %v333 = vld [vmem:[#allocation4] sm:$0xff]
    %v334 = vld [vmem:[#allocation4 + $0x8] sm:$0xff]
    %v335 = vld [vmem:[#allocation4 + $0x10] sm:$0xff]
    %v336 = vld [vmem:[#allocation4 + $0x18] sm:$0xff]
    %v337 = vld [vmem:[#allocation4 + $0x20] sm:$0xff]
    %v338 = vld [vmem:[#allocation4 + $0x28] sm:$0xff]
    %v339 = vld [vmem:[#allocation4 + $0x30] sm:$0xff]
    %v340 = vld [vmem:[#allocation4 + $0x38] sm:$0xff]
    %v341 = vld [vmem:[#allocation4 + $0x40] sm:$0xff]
    %v342 = vld [vmem:[#allocation4 + $0x48] sm:$0xff]
    %v343 = vld [vmem:[#allocation4 + $0x50] sm:$0xff]
    %v344 = vld [vmem:[#allocation4 + $0x58] sm:$0xff]
    %v345 = vld [vmem:[#allocation4 + $0x60] sm:$0xff]
    %v346 = vld [vmem:[#allocation4 + $0x68] sm:$0xff]
    %v347 = vld [vmem:[#allocation4 + $0x70] sm:$0xff]
    %v348 = vld [vmem:[#allocation4 + $0x78] sm:$0xff]
    %v349 = vld [vmem:[#allocation4 + $0x80] sm:$0xff]
    %v350 = vld [vmem:[#allocation4 + $0x88] sm:$0xff]
    %v351 = vld [vmem:[#allocation4 + $0x90] sm:$0xff]
    %v352 = vld [vmem:[#allocation4 + $0x98] sm:$0xff]
    %v353 = vld [vmem:[#allocation4 + $0xa0] sm:$0xff]
    %v354 = vld [vmem:[#allocation4 + $0xa8] sm:$0xff]
    %v355 = vld [vmem:[#allocation4 + $0xb0] sm:$0xff]
    %v356 = vld [vmem:[#allocation4 + $0xb8] sm:$0xff]
    %v357 = vld [vmem:[#allocation4 + $0xc0] sm:$0xff]
    %v358 = vld [vmem:[#allocation4 + $0xc8] sm:$0xff]
    %v359 = vld [vmem:[#allocation4 + $0xd0] sm:$0xff]
    %v360 = vld [vmem:[#allocation4 + $0xd8] sm:$0xff]
    %v361 = vld [vmem:[#allocation4 + $0xe0] sm:$0xff]
    %v362 = vld [vmem:[#allocation4 + $0xe8] sm:$0xff]
    %v363 = vld [vmem:[#allocation4 + $0xf0] sm:$0xff]
    %v364 = vld [vmem:[#allocation4 + $0xf8] sm:$0xff]
    %v397 = vunpack.c.l.b16 %v333
    %v398 = vunpack.c.h.b16 %v333
    %v399 = vunpack.c.l.b16 %v334
    %v400 = vunpack.c.h.b16 %v334
    %v401 = vunpack.c.l.b16 %v335
    %v402 = vunpack.c.h.b16 %v335
    %v403 = vunpack.c.l.b16 %v336
    %v404 = vunpack.c.h.b16 %v336
    %v405 = vunpack.c.l.b16 %v337
    %v406 = vunpack.c.h.b16 %v337
    %v407 = vunpack.c.l.b16 %v338
    %v408 = vunpack.c.h.b16 %v338
    %v409 = vunpack.c.l.b16 %v339
    %v410 = vunpack.c.h.b16 %v339
    %v411 = vunpack.c.l.b16 %v340
    %v412 = vunpack.c.h.b16 %v340
    %v413 = vunpack.c.l.b16 %v341
    %v414 = vunpack.c.h.b16 %v341
    %v415 = vunpack.c.l.b16 %v342
    %v416 = vunpack.c.h.b16 %v342
    %v417 = vunpack.c.l.b16 %v343
    %v418 = vunpack.c.h.b16 %v343
    %v419 = vunpack.c.l.b16 %v344
    %v420 = vunpack.c.h.b16 %v344
    %v421 = vunpack.c.l.b16 %v345
    %v422 = vunpack.c.h.b16 %v345
    %v423 = vunpack.c.l.b16 %v346
    %v424 = vunpack.c.h.b16 %v346
    %v425 = vunpack.c.l.b16 %v347
    %v426 = vunpack.c.h.b16 %v347
    %v427 = vunpack.c.l.b16 %v348
    %v428 = vunpack.c.h.b16 %v348
    %v429 = vunpack.c.l.b16 %v349
    %v430 = vunpack.c.h.b16 %v349
    %v431 = vunpack.c.l.b16 %v350
    %v432 = vunpack.c.h.b16 %v350
    %v433 = vunpack.c.l.b16 %v351
    %v434 = vunpack.c.h.b16 %v351
    %v435 = vunpack.c.l.b16 %v352
    %v436 = vunpack.c.h.b16 %v352
    %v437 = vunpack.c.l.b16 %v353
    %v438 = vunpack.c.h.b16 %v353
    %v439 = vunpack.c.l.b16 %v354
    %v440 = vunpack.c.h.b16 %v354
    %v441 = vunpack.c.l.b16 %v355
    %v442 = vunpack.c.h.b16 %v355
    %v443 = vunpack.c.l.b16 %v356
    %v444 = vunpack.c.h.b16 %v356
    %v445 = vunpack.c.l.b16 %v357
    %v446 = vunpack.c.h.b16 %v357
    %v447 = vunpack.c.l.b16 %v358
    %v448 = vunpack.c.h.b16 %v358
    %v449 = vunpack.c.l.b16 %v359
    %v450 = vunpack.c.h.b16 %v359
    %v451 = vunpack.c.l.b16 %v360
    %v452 = vunpack.c.h.b16 %v360
    %v453 = vunpack.c.l.b16 %v361
    %v454 = vunpack.c.h.b16 %v361
    %v455 = vunpack.c.l.b16 %v362
    %v456 = vunpack.c.h.b16 %v362
    %v457 = vunpack.c.l.b16 %v363
    %v458 = vunpack.c.h.b16 %v363
    %v459 = vunpack.c.l.b16 %v364
    %v460 = vunpack.c.h.b16 %v364
    %v461 = vpack.c.b16 %v399, %v397
    %v462 = vpack.c.b16 %v400, %v398
    %v463 = vpack.c.b16 %v403, %v401
    %v464 = vpack.c.b16 %v404, %v402
    %v465 = vpack.c.b16 %v407, %v405
    %v466 = vpack.c.b16 %v408, %v406
    %v467 = vpack.c.b16 %v411, %v409
    %v468 = vpack.c.b16 %v412, %v410
    %v469 = vpack.c.b16 %v415, %v413
    %v470 = vpack.c.b16 %v416, %v414
    %v471 = vpack.c.b16 %v419, %v417
    %v472 = vpack.c.b16 %v420, %v418
    %v473 = vpack.c.b16 %v423, %v421
    %v474 = vpack.c.b16 %v424, %v422
    %v475 = vpack.c.b16 %v427, %v425
    %v476 = vpack.c.b16 %v428, %v426
    %v477 = vpack.c.b16 %v431, %v429
    %v478 = vpack.c.b16 %v432, %v430
    %v479 = vpack.c.b16 %v435, %v433
    %v480 = vpack.c.b16 %v436, %v434
    %v481 = vpack.c.b16 %v439, %v437
    %v482 = vpack.c.b16 %v440, %v438
    %v483 = vpack.c.b16 %v443, %v441
    %v484 = vpack.c.b16 %v444, %v442
    %v485 = vpack.c.b16 %v447, %v445
    %v486 = vpack.c.b16 %v448, %v446
    %v487 = vpack.c.b16 %v451, %v449
    %v488 = vpack.c.b16 %v452, %v450
    %v489 = vpack.c.b16 %v455, %v453
    %v490 = vpack.c.b16 %v456, %v454
    %v491 = vpack.c.b16 %v459, %v457
    %v492 = vpack.c.b16 %v460, %v458
    %525 = vmatprep.subr.bf16.mxu0 %v462
    %526 = vmatpush1.bf16.msra.mxu0 %v461
    %527 = vmatprep.subr.bf16.mxu0 %v464
    %528 = vmatpush1.bf16.msra.mxu0 %v463
    %529 = vmatprep.subr.bf16.mxu0 %v466
    %530 = vmatpush1.bf16.msra.mxu0 %v465
    %531 = vmatprep.subr.bf16.mxu0 %v468
    %532 = vmatpush1.bf16.msra.mxu0 %v467
    %533 = vmatprep.subr.bf16.mxu0 %v470
    %534 = vmatpush1.bf16.msra.mxu0 %v469
    %535 = vmatprep.subr.bf16.mxu0 %v472
    %536 = vmatpush1.bf16.msra.mxu0 %v471
    %537 = vmatprep.subr.bf16.mxu0 %v474
    %538 = vmatpush1.bf16.msra.mxu0 %v473
    %539 = vmatprep.subr.bf16.mxu0 %v476
    %540 = vmatpush1.bf16.msra.mxu0 %v475
    %541 = vmatprep.subr.bf16.mxu0 %v478
    %542 = vmatpush1.bf16.msra.mxu0 %v477
    %543 = vmatprep.subr.bf16.mxu0 %v480
    %544 = vmatpush1.bf16.msra.mxu0 %v479
    %545 = vmatprep.subr.bf16.mxu0 %v482
    %546 = vmatpush1.bf16.msra.mxu0 %v481
    %547 = vmatprep.subr.bf16.mxu0 %v484
    %548 = vmatpush1.bf16.msra.mxu0 %v483
    %549 = vmatprep.subr.bf16.mxu0 %v486
    %550 = vmatpush1.bf16.msra.mxu0 %v485
    %551 = vmatprep.subr.bf16.mxu0 %v488
    %552 = vmatpush1.bf16.msra.mxu0 %v487
    %553 = vmatprep.subr.bf16.mxu0 %v490
    %554 = vmatpush1.bf16.msra.mxu0 %v489
    %555 = vmatprep.subr.bf16.mxu0 %v492
    %556 = vmatpush1.bf16.msra.mxu0 %v491
    %557 = vmatprep.mubr.bf16.mxu0 %v332
    %558 = vmatmul.mubr.bf16.gmra.mrb[0].mxu0 %v331
    %v559 = vpop.f32.mrb[0].mxu0
    %v560 = vadd.f32 0.0, %v559
    %v561 = vpop.f32.mrb[0].mxu0
    %v562 = vadd.f32 0.0, %v561
    %v563 = vpop.f32.mrb[0].mxu0
    %v564 = vadd.f32 0.0, %v563
    %v565 = vpop.f32.mrb[0].mxu0
    %v566 = vadd.f32 0.0, %v565
    %567 = vdwg.mxu0
    %v568 = vld [vmem:[%s5] sm:$0x3]
    %v570 = vlaneseq
    %v571 = vshrl.u32 %v570, 7
    %v572 = vsub.s32 0, %v571
    %v573 = vrot.slane %v568, %v572
    %v574 = vlaneseq
    %v575 = vshrl.u32 %v574, 7
    %v576 = vsub.s32 1, %v575
    %v577 = vrot.slane %v568, %v576
    %v580 = vmul.f32 %v560, %v573
    %v581 = vmul.f32 %v562, %v577
    %v582 = vmul.f32 %v564, %v573
    %v583 = vmul.f32 %v566, %v577
    %v584 = vld [vmem:[%s6] sm:$0x3]
    %v586 = vlaneseq
    %v587 = vshrl.u32 %v586, 7
    %v588 = vsub.s32 0, %v587
    %v589 = vrot.slane %v584, %v588
    %v590 = vlaneseq
    %v591 = vshrl.u32 %v590, 7
    %v592 = vsub.s32 1, %v591
    %v593 = vrot.slane %v584, %v592
    %v596 = vadd.f32 %v580, %v589
    %v597 = vadd.f32 %v581, %v593
    %v598 = vadd.f32 %v582, %v589
    %v599 = vadd.f32 %v583, %v593
    %v600 = vadd.f32 %v596, %v54
    %v601 = vadd.f32 %v597, %v55
    %v602 = vadd.f32 %v598, %v56
    %v603 = vadd.f32 %v599, %v57
    %v604 = vmax.f32 %v600, 0.0
    %v605 = vmax.f32 %v601, 0.0
    %v606 = vmax.f32 %v602, 0.0
    %v607 = vmax.f32 %v603, 0.0
    %608 = vst [vmem:[%s7] sm:$0xff] %v604
    %609 = vst [vmem:[%s7 + $0x8] sm:$0xff] %v605
    %610 = vst [vmem:[%s7 + $0x10] sm:$0xff] %v606
    %611 = vst [vmem:[%s7 + $0x18] sm:$0xff] %v607
    // Predicated region
    $region38: #{attention_net_forward.1} parent=1 // pred_check
      _
    $region39: #{attention_net_forward.1} parent=1 // pred_check_branch
      %613 = sbr.rel (0) target = $region41
    $region40: #{attention_net_forward.1} parent=1 // pred_region
      _
    $region41: #{attention_net_forward.1} parent=1 // pred_fallthru
      _
    // Predicated region
    $region42: #{attention_net_forward.1} parent=1 // pred_check
      _
    $region43: #{attention_net_forward.1} parent=1 // pred_check_branch
      %615 = sbr.rel (0) target = $region45
    $region44: #{attention_net_forward.1} parent=1 // pred_region
      _
    $region45: #{attention_net_forward.1} parent=1 // pred_fallthru
      _
    %616 = vsyncpa [#allocation3], 1
    %617 = vsyncpa [#allocation5], 1

</llo_original>
